<compile_context>
chip_gen: v6e
topology: v6e:2x2x1
jax: 0.10.0
libtpu: 0.0.40
codegen_flags: <defaults>
</compile_context>

<pallas_src>
import functools

import jax
import jax.numpy as jnp
from jax import lax
from jax.experimental import pallas as pl
from jax.experimental.pallas import tpu as pltpu

dense_sampling_L = 20
num_of_adc_p = 4
num_rx_antenas = 6

F_IN = num_rx_antenas * dense_sampling_L    # 120
F_OUT = num_of_adc_p * dense_sampling_L     # 80

# Default batch-tile cap.  Safe against default scoped VMEM on all generations
# while large enough to amortize per-step grid overhead.  Pass tb=8192/16384
# explicitly on v7x if profiling shows further headroom.
_DEFAULT_TB_CAP = 4096

# Below this batch the whole problem is <~1 MB; custom-call fixed overhead
# dominates and XLA's fused dot is at least as fast.
_SMALL_BATCH_XLA_THRESHOLD = 512


def _round_up(n, m):
    return ((n + m - 1) // m) * m


def _select_tb(batch, cap):
    """Pick a batch tile: big enough for the HBM roofline, >=2 steps for megacore."""
    tb = min(cap, _round_up(batch, 8))
    # Guarantee at least 2 grid steps for large batches so the 'parallel'
    # batch axis can shard across v7x's two TensorCores (a single-step grid
    # leaves one core idle).
    if batch > _SMALL_BATCH_XLA_THRESHOLD and pl.cdiv(batch, tb) < 2:
        tb = _round_up(pl.cdiv(batch, 2), 8)
    return tb


def _analog_filter_kernel(x_ref, w_ref, o_ref):
    # x_ref: [tb, F_IN]    (VMEM, batch tile)
    # w_ref: [F_OUT, F_IN] (VMEM, nn.Linear layout, resident across grid steps)
    # o_ref: [tb, F_OUT]   (VMEM)
    # Contract last axes of both operands -> no transpose of the weight needed.
    o_ref[...] = lax.dot_general(
        x_ref[...],
        w_ref[...],
        dimension_numbers=(((1,), (1,)), ((), ())),
        preferred_element_type=jnp.float32,
    ).astype(o_ref.dtype)


@functools.partial(jax.jit, static_argnames=("tb", "force_pallas"))
def analog_network_forward(x, weight, *, tb=None, force_pallas=False):
    """x: [B, F_IN], weight: [F_OUT, F_IN] (f32 or bf16) -> [B, F_OUT]."""
    B = x.shape[0]
    out_dtype = jnp.promote_types(x.dtype, weight.dtype)

    # Tiny-batch path: let XLA's fused dot handle it (avoids regressing small B).
    if not force_pallas and B <= _SMALL_BATCH_XLA_THRESHOLD:
        return lax.dot_general(
            x, weight,
            dimension_numbers=(((1,), (1,)), ((), ())),
            preferred_element_type=jnp.float32,
        ).astype(out_dtype)

    if tb is None:
        tb = _select_tb(B, _DEFAULT_TB_CAP)
    else:
        tb = min(tb, _round_up(B, 8))
    grid = (pl.cdiv(B, tb),)

    isx = jnp.dtype(x.dtype).itemsize
    isw = jnp.dtype(weight.dtype).itemsize
    iso = jnp.dtype(out_dtype).itemsize

    cost = pl.CostEstimate(
        flops=2 * B * F_IN * F_OUT,
        transcendentals=0,
        bytes_accessed=B * F_IN * isx + F_OUT * F_IN * isw + B * F_OUT * iso,
    )

    compiler_kwargs = dict(dimension_semantics=("parallel",))
    if tb > _DEFAULT_TB_CAP:
        # Oversized tiles (e.g. 8192-16384 on v7x) exceed the default scoped
        # VMEM on some generations; size the limit to the double-buffered
        # blocks + resident weight + scratch headroom.
        block_bytes = 2 * tb * (F_IN * isx + F_OUT * iso)
        weight_bytes = 2 * F_OUT * F_IN * isw
        compiler_kwargs["vmem_limit_bytes"] = int(block_bytes + weight_bytes + (4 << 20))

    return pl.pallas_call(
        _analog_filter_kernel,
        out_shape=jax.ShapeDtypeStruct((B, F_OUT), out_dtype),
        grid_spec=pltpu.PrefetchScalarGridSpec(
            num_scalar_prefetch=0,
            grid=grid,
            in_specs=[
                # Batch tile of x; prefetch of tile i+1 overlaps compute on i.
                # If a v7x bundle dump shows exposed x DMA even at large tiles,
                # add pipeline_mode=pl.Buffered(3) here (profile-gated).
                pl.BlockSpec((tb, F_IN), lambda i: (i, 0)),
                # Constant block index -> weight is DMA'd once, stays in VMEM.
                pl.BlockSpec((F_OUT, F_IN), lambda i: (0, 0)),
            ],
            out_specs=pl.BlockSpec((tb, F_OUT), lambda i: (i, 0)),
        ),
        compiler_params=pltpu.CompilerParams(**compiler_kwargs),
        cost_estimate=cost,
    )(x, weight)


def init_params(key, dtype=jnp.float32):
    # Mimic nn.Linear default init: U(-1/sqrt(fan_in), 1/sqrt(fan_in)), bias=False.
    bound = 1.0 / jnp.sqrt(jnp.float32(F_IN))
    w = jax.random.uniform(
        key, (F_OUT, F_IN), dtype=jnp.float32, minval=-bound, maxval=bound
    )
    return w.astype(dtype)


if __name__ == "__main__":
    key = jax.random.PRNGKey(0)
    k_w, k_x, k_x2, k_x3 = jax.random.split(key, 4)

    weight = init_params(k_w)  # [80, 120] float32

    # 1) Small batch, kernel forced (single grid step, tb clamps to 8).
    B = 8
    x = jax.random.normal(k_x, (B, F_IN), dtype=jnp.float32)  # [8, 120]
    out = jax.block_until_ready(analog_network_forward(x, weight, force_pallas=True))
    ref = x @ weight.T
    assert out.shape == (B, F_OUT)
    assert jnp.allclose(out, ref, atol=1e-4, rtol=1e-4)

    # 2) Partial / padded boundary tile (B not a multiple of 8), kernel forced.
    B2 = 300
    x2 = jax.random.normal(k_x2, (B2, F_IN), dtype=jnp.float32)
    out2 = jax.block_until_ready(analog_network_forward(x2, weight, force_pallas=True))
    ref2 = x2 @ weight.T
    assert out2.shape == (B2, F_OUT)
    assert jnp.allclose(out2, ref2, atol=1e-4, rtol=1e-4)

    # 3) Multi-step grid (default dispatch -> pallas): exercises the large-tile
    #    path, the >=2-step megacore guarantee, and the masked last tile.
    B3 = 4500
    x3 = jax.random.normal(k_x3, (B3, F_IN), dtype=jnp.float32)
    out3 = jax.block_until_ready(analog_network_forward(x3, weight))
    ref3 = x3 @ weight.T
    assert out3.shape == (B3, F_OUT)
    assert jnp.allclose(out3, ref3, atol=1e-3, rtol=1e-4)

    # 4) bf16 inputs accepted natively (no wrapper cast), f32 MXU accumulation.
    xb = x2.astype(jnp.bfloat16)
    wb = weight.astype(jnp.bfloat16)
    outb = jax.block_until_ready(analog_network_forward(xb, wb, force_pallas=True))
    refb = (xb.astype(jnp.float32) @ wb.astype(jnp.float32).T)
    assert outb.dtype == jnp.bfloat16
    assert jnp.allclose(outb.astype(jnp.float32), refb, atol=5e-2, rtol=5e-2)

    # 5) Tiny-batch default dispatch goes through XLA's fused dot (no pallas).
    out5 = jax.block_until_ready(analog_network_forward(x, weight))
    assert jnp.allclose(out5, ref, atol=1e-4, rtol=1e-4)

    print("KERNEL_OK")
</pallas_src>

<mosaic_0001>
module attributes {stable_mosaic.version = 11 : i64} {
  func.func @_analog_filter_kernel(%arg0: i32, %arg1: memref<8x120xf32, #tpu.memory_space<vmem>>, %arg2: memref<80x120xf32, #tpu.memory_space<vmem>>, %arg3: memref<8x80xf32, #tpu.memory_space<vmem>>) attributes {dimension_semantics = [#tpu.dimension_semantics<parallel>], iteration_bounds = array<i64: 1>, scalar_prefetch = 0 : i64, scratch_operands = 0 : i64, tpu.core_type = #tpu.core_type<tc>, window_params = [{transform_indices = @transform_0, window_bounds = array<i64: 8, 120>}, {pipeline_mode = #tpu.pipeline_mode<synchronous>, transform_indices = @transform_1, window_bounds = array<i64: 80, 120>}, {transform_indices = @transform_2, window_bounds = array<i64: 8, 80>}]} {
    %c0 = arith.constant 0 : index
    %c0_0 = arith.constant 0 : index
    %0 = vector.load %arg1[%c0, %c0_0] : memref<8x120xf32, #tpu.memory_space<vmem>>, vector<8x120xf32>
    %c0_1 = arith.constant 0 : index
    %c0_2 = arith.constant 0 : index
    %1 = vector.load %arg2[%c0_1, %c0_2] : memref<80x120xf32, #tpu.memory_space<vmem>>, vector<80x120xf32>
    %cst = arith.constant dense<0.000000e+00> : vector<8x80xf32>
    %2 = tpu.matmul %0, %1, %cst {dimension_numbers = #tpu.dot_dimension_numbers<[1], [1], [0], [0], [0, 0, 1, 0], [], []>} : vector<8x120xf32>, vector<80x120xf32>, vector<8x80xf32> -> vector<8x80xf32>
    %c0_3 = arith.constant 0 : index
    %c0_4 = arith.constant 0 : index
    %3 = vector.load %arg3[%c0_3, %c0_4] : memref<8x80xf32, #tpu.memory_space<vmem>>, vector<8x80xf32>
    tpu.vector_store %arg3[%c0_3, %c0_4], %2 {strides = array<i32>} : memref<8x80xf32, #tpu.memory_space<vmem>>, vector<8x80xf32>,
    return
  }
  func.func @transform_0(%arg0: i32) -> (i32, i32) {
    %c0_i32 = arith.constant 0 : i32
    %c0_i32_0 = arith.constant 0 : i32
    return %arg0, %c0_i32 : i32, i32
  }
  func.func @transform_1(%arg0: i32) -> (i32, i32) {
    %c0_i32 = arith.constant 0 : i32
    %c0_i32_0 = arith.constant 0 : i32
    %c0_i32_1 = arith.constant 0 : i32
    return %c0_i32, %c0_i32_0 : i32, i32
  }
  func.func @transform_2(%arg0: i32) -> (i32, i32) {
    %c0_i32 = arith.constant 0 : i32
    %c0_i32_0 = arith.constant 0 : i32
    return %arg0, %c0_i32 : i32, i32
  }
}

</mosaic_0001>

<llo_original>
// kernel: analog_network_forward.1
$region0: #{analog_network_forward.1}
  #allocation0 [shape = 'u32[]', space=smem, size = 0x4, offset = 0x4, fixed_abs, tag = 'smem constant byte address 0x4 - core index']
  #allocation1 [shape = 'u32[144,128]{1,0:T(1,128)}', space=vmem, size = 0x12000, scoped, tag = 'internal scratch']
  %s0 = inlined_call_operand.hbm [shape: f32[8,120], index: 0, kind: input, shape index: {}]
  %s1 = inlined_call_operand.hbm [shape: f32[80,120], index: 1, kind: input, shape index: {}]
  %s2 = inlined_call_operand.hbm [shape: f32[8,80], index: 2, kind: output, shape index: {}]
  %s3 = sld [smem:[#allocation0]]
  $region26: #{analog_network_forward.1} parent=0
    _
  %s5 = ssub.s32 1, %s3
  %s6 = scalar_select 0, %s5, %s3
  $region1: #{analog_network_forward.1} parent=0
    #allocation2 [shape = 'u8[4096]{0}', space=vmem, size = 0x1000, scoped, tag = 'input window, operand 0, single buffered']
    #allocation3 [shape = 's32[1]{0}', space=sflag, size = 0x4, scoped, tag = 'scoped memory for analog_network_forward.1']
    #allocation4 [shape = 's32[1]{0}', space=sflag, size = 0x4, scoped, tag = 'scoped memory for analog_network_forward.1']
    #allocation5 [shape = 'u8[40960]{0}', space=vmem, size = 0xa000, scoped, tag = 'input window, operand 1, single buffered']
    #allocation6 [shape = 's32[1]{0}', space=sflag, size = 0x4, scoped, tag = 'scoped memory for analog_network_forward.1']
    #allocation7 [shape = 'u8[4096]{0}', space=vmem, size = 0x1000, scoped, tag = 'output window, operand 0, single buffered']
    %7 = vsyncpa [#allocation3], 0
    %8 = vsyncpa [#allocation6], 0
    %9 = vsyncpa [#allocation4], 0
    // Predicated region
    $region2: #{analog_network_forward.1} parent=1 // pred_check
      _
    $region3: #{analog_network_forward.1} parent=1 // pred_check_branch
      %11 = sbr.rel (0) target = $region5
    $region4: #{analog_network_forward.1} parent=1 // pred_region
      %s13 = ssub.s32 128, 128
      %14 = vsyncadd [#allocation3], %s13
      %s16 = sshll.u32 [#allocation2], 4
      %s17 = int_to_ptr.vmem [resolvable:$true] %s16
      %19 = dma.hbm_to_vmem [thread:$0]  %s0, 128, %s17, [#allocation3]
    $region5: #{analog_network_forward.1} parent=1 // pred_fallthru
      _
    // Predicated region
    $region6: #{analog_network_forward.1} parent=1 // pred_check
      _
    $region7: #{analog_network_forward.1} parent=1 // pred_check_branch
      %21 = sbr.rel (0) target = $region9
    $region8: #{analog_network_forward.1} parent=1 // pred_region
      %s23 = ssub.s32 1280, 1280
      %24 = vsyncadd [#allocation6], %s23
      %s25 = sshll.u32 [#allocation5], 4
      %s26 = int_to_ptr.vmem [resolvable:$true] %s25
      %31 = dma.hbm_to_vmem [thread:$0]  %s1, 1280, %s26, [#allocation6], 128, 128, 8
    $region9: #{analog_network_forward.1} parent=1 // pred_fallthru
      _
    // Predicated region
    $region10: #{analog_network_forward.1} parent=1 // pred_check
      _
    $region11: #{analog_network_forward.1} parent=1 // pred_check_branch
      %33 = sbr.rel (0) target = $region13
    $region12: #{analog_network_forward.1} parent=1 // pred_region
      %34 = dma.done [#allocation3], 128
    $region13: #{analog_network_forward.1} parent=1 // pred_fallthru
      _
    // Predicated region
    $region14: #{analog_network_forward.1} parent=1 // pred_check
      _
    $region15: #{analog_network_forward.1} parent=1 // pred_check_branch
      %36 = sbr.rel (0) target = $region17
    $region16: #{analog_network_forward.1} parent=1 // pred_region
      %37 = dma.done [#allocation6], 1280
    $region17: #{analog_network_forward.1} parent=1 // pred_fallthru
      _
    %v38 = vld [vmem:[#allocation2] sm:$0xff]
    %v39 = vld [vmem:[#allocation5] sm:$0xff]
    %v40 = vld [vmem:[#allocation5 + $0x8] sm:$0xff]
    %v41 = vld [vmem:[#allocation5 + $0x10] sm:$0xff]
    %v42 = vld [vmem:[#allocation5 + $0x18] sm:$0xff]
    %v43 = vld [vmem:[#allocation5 + $0x20] sm:$0xff]
    %v44 = vld [vmem:[#allocation5 + $0x28] sm:$0xff]
    %v45 = vld [vmem:[#allocation5 + $0x30] sm:$0xff]
    %v46 = vld [vmem:[#allocation5 + $0x38] sm:$0xff]
    %v47 = vld [vmem:[#allocation5 + $0x40] sm:$0xff]
    %v48 = vld [vmem:[#allocation5 + $0x48] sm:$0xff]
    %vm49 = vcmask 982016
    %v51 = vsel %vm49, %v38, 0
    %v54 = vsel %vm49, %v39, 0
    %v57 = vsel %vm49, %v40, 0
    %v60 = vsel %vm49, %v41, 0
    %v63 = vsel %vm49, %v42, 0
    %v66 = vsel %vm49, %v43, 0
    %v69 = vsel %vm49, %v44, 0
    %v72 = vsel %vm49, %v45, 0
    %v75 = vsel %vm49, %v46, 0
    %v78 = vsel %vm49, %v47, 0
    %v81 = vsel %vm49, %v48, 0
    %83 = vmatprep.subr.mxu0 0.0
    %84 = vmatpush1.xpose.msra.mxu0 0.0
    %85 = vmatprep.subr.mxu0 0.0
    %86 = vmatpush1.xpose.msra.mxu0 0.0
    %87 = vmatprep.subr.mxu0 0.0
    %88 = vmatpush1.xpose.msra.mxu0 0.0
    %89 = vmatprep.subr.mxu0 0.0
    %90 = vmatpush1.xpose.msra.mxu0 0.0
    %91 = vmatprep.subr.mxu0 0.0
    %92 = vmatpush1.xpose.msra.mxu0 0.0
    %93 = vmatprep.subr.mxu0 0.0
    %94 = vmatpush1.xpose.msra.mxu0 0.0
    %95 = vmatprep.subr.mxu0 0.0
    %96 = vmatpush1.xpose.msra.mxu0 %v81
    %97 = vmatprep.subr.mxu0 0.0
    %98 = vmatpush1.xpose.msra.mxu0 %v78
    %99 = vmatprep.subr.mxu0 0.0
    %100 = vmatpush1.xpose.msra.mxu0 %v75
    %101 = vmatprep.subr.mxu0 0.0
    %102 = vmatpush1.xpose.msra.mxu0 %v72
    %103 = vmatprep.subr.mxu0 0.0
    %104 = vmatpush1.xpose.msra.mxu0 %v69
    %105 = vmatprep.subr.mxu0 0.0
    %106 = vmatpush1.xpose.msra.mxu0 %v66
    %107 = vmatprep.subr.mxu0 0.0
    %108 = vmatpush1.xpose.msra.mxu0 %v63
    %109 = vmatprep.subr.mxu0 0.0
    %110 = vmatpush1.xpose.msra.mxu0 %v60
    %111 = vmatprep.subr.mxu0 0.0
    %112 = vmatpush1.xpose.msra.mxu0 %v57
    %113 = vmatprep.subr.mxu0 0.0
    %114 = vmatpush1.xpose.msra.mxu0 %v54
    %115 = vmatprep.subr.mxu0 0.0
    %116 = vmatpush2.xpose.msra.mxu0 0.0
    %117 = vmatprep.subr.mxu0 0.0
    %118 = vmatpush2.xpose.msra.mxu0 0.0
    %119 = vmatprep.subr.mxu0 0.0
    %120 = vmatpush2.xpose.msra.mxu0 0.0
    %121 = vmatprep.subr.mxu0 0.0
    %122 = vmatpush2.xpose.msra.mxu0 0.0
    %123 = vmatprep.subr.mxu0 0.0
    %124 = vmatpush2.xpose.msra.mxu0 0.0
    %125 = vmatprep.subr.mxu0 0.0
    %126 = vmatpush2.xpose.msra.mxu0 0.0
    %127 = vmatprep.subr.mxu0 0.0
    %128 = vmatpush2.xpose.msra.mxu0 0.0
    %129 = vmatprep.subr.mxu0 0.0
    %130 = vmatpush2.xpose.msra.mxu0 0.0
    %131 = vmatprep.subr.mxu0 0.0
    %132 = vmatpush2.xpose.msra.mxu0 0.0
    %133 = vmatprep.subr.mxu0 0.0
    %134 = vmatpush2.xpose.msra.mxu0 0.0
    %135 = vmatprep.subr.mxu0 0.0
    %136 = vmatpush2.xpose.msra.mxu0 0.0
    %137 = vmatprep.subr.mxu0 0.0
    %138 = vmatpush2.xpose.msra.mxu0 0.0
    %139 = vmatprep.subr.mxu0 0.0
    %140 = vmatpush2.xpose.msra.mxu0 0.0
    %141 = vmatprep.subr.mxu0 0.0
    %142 = vmatpush2.xpose.msra.mxu0 0.0
    %143 = vmatprep.subr.mxu0 0.0
    %144 = vmatpush2.xpose.msra.mxu0 0.0
    %145 = vmatprep.subr.mxu0 0.0
    %146 = vmatpush2.xpose.msra.mxu0 0.0
    %147 = vmatprep.mubr.f32.mxu0 0.0
    %148 = vmatmul.mubr.f32.gmra.mxu0 %v51
    %v149 = vpop.f32.mrf.mxu0
    %v150 = vadd.f32 0.0, %v149
    %v151 = vpop.f32.mrf.mxu0
    %152 = vdwg.mxu0
    %vm153 = vcmask 654336
    %154 = vst.msk [vmem:[#allocation7] sm:$0xff] %vm153, %v150
    // Predicated region
    $region18: #{analog_network_forward.1} parent=1 // pred_check
      _
    $region19: #{analog_network_forward.1} parent=1 // pred_check_branch
      %156 = sbr.rel (0) target = $region21
    $region20: #{analog_network_forward.1} parent=1 // pred_region
      %s158 = ssub.s32 128, 128
      %159 = vsyncadd [#allocation4], %s158
      %s161 = sshll.u32 [#allocation7], 4
      %s162 = int_to_ptr.vmem [resolvable:$true] %s161
      %164 = dma.vmem_to_hbm [thread:$0]  %s162, 128, %s2, [#allocation4]
    $region21: #{analog_network_forward.1} parent=1 // pred_fallthru
      _
    // Predicated region
    $region22: #{analog_network_forward.1} parent=1 // pred_check
      _
    $region23: #{analog_network_forward.1} parent=1 // pred_check_branch
      %166 = sbr.rel (0) target = $region25
    $region24: #{analog_network_forward.1} parent=1 // pred_region
      %167 = dma.done [#allocation4], 128
    $region25: #{analog_network_forward.1} parent=1 // pred_fallthru
      _
    %168 = vsyncpa [#allocation3], 1
    %169 = vsyncpa [#allocation6], 1
    %170 = vsyncpa [#allocation4], 1

</llo_original>
